<compile_context>
chip_gen: v5e
topology: v5e:2x2
jax: 0.10.0
libtpu: 0.0.40
codegen_flags: <defaults>
</compile_context>

<pallas_src>
import functools
import math

import jax
import jax.numpy as jnp
from jax.experimental import pallas as pl
from jax.experimental.pallas import tpu as pltpu


def _round_down(x, m):
    return (x // m) * m


# ------------------------------------------------------------------ kernels --

def _linear_kernel(x_ref, w_ref, b_ref, o_ref):
    # Single K block: y = x @ w + b with f32 accumulation on the MXU.
    acc = jnp.dot(x_ref[...], w_ref[...], preferred_element_type=jnp.float32)
    o_ref[...] = (acc + b_ref[...].astype(jnp.float32)).astype(o_ref.dtype)


def _linear_kernel_acc(x_ref, w_ref, b_ref, o_ref, acc_ref):
    # K is tiled: accumulate in f32 scratch, write out on the last K step.
    @pl.when(pl.program_id(2) == 0)
    def _init():
        acc_ref[...] = jnp.zeros_like(acc_ref)

    acc_ref[...] += jnp.dot(x_ref[...], w_ref[...],
                            preferred_element_type=jnp.float32)

    @pl.when(pl.program_id(2) == pl.num_programs(2) - 1)
    def _finalize():
        o_ref[...] = (acc_ref[...] + b_ref[...].astype(jnp.float32)
                      ).astype(o_ref.dtype)


# ----------------------------------------------------------------- 2-D core --

def _linear_2d(x2d, w_t, b2d, *, out_dtype, tm_cap=1024):
    """y2d = x2d @ w_t + b2d, tiled over (M, N, K)."""
    M, K = x2d.shape
    Kw, N = w_t.shape
    assert K == Kw, (K, Kw)

    itemsize = jnp.dtype(x2d.dtype).itemsize
    sub = 32 // itemsize          # sublane multiple: 8 (f32), 16 (bf16), 32 (i8)

    # N tile (parallel axis): lane dim must be a multiple of 128 or the full N.
    if N <= 512 or N % 128 != 0:
        tn = N
    else:
        tn = 512

    # K tile (reduction axis): only tile when K splits into clean 128-multiples
    # (a ragged K block would pollute the accumulation).
    tk = K
    if K > 2048:
        for cand in (2048, 1536, 1024, 512, 256, 128):
            if K % cand == 0:
                tk = cand
                break

    # M tile: as large as VMEM comfortably allows (amortize per-step overhead).
    if M <= tm_cap:
        tm = M                    # single full-dim block is always layout-legal
    else:
        tm = max(sub, _round_down(tm_cap, sub))

    def vmem_need(tm_):
        need = 2 * (tm_ * tk + tk * tn + tn) * itemsize        # input dbl-bufs
        need += 2 * tm_ * tn * jnp.dtype(out_dtype).itemsize   # output dbl-buf
        if tk < K:
            need += tm_ * tn * 4                               # f32 accumulator
        return need

    # Stay well under the v7x 32 MiB scoped default even after double-buffering.
    while tm > sub and vmem_need(tm) > 28 * 1024 * 1024:
        tm = max(sub, _round_down(tm // 2, sub))

    grid = (pl.cdiv(M, tm), pl.cdiv(N, tn), pl.cdiv(K, tk))
    use_acc = grid[2] > 1
    kernel = _linear_kernel_acc if use_acc else _linear_kernel
    scratch = [pltpu.VMEM((tm, tn), jnp.float32)] if use_acc else []

    cost = pl.CostEstimate(
        flops=2 * M * K * N,
        transcendentals=0,
        bytes_accessed=(x2d.size * itemsize
                        + w_t.size * jnp.dtype(w_t.dtype).itemsize
                        + b2d.size * jnp.dtype(b2d.dtype).itemsize
                        + M * N * jnp.dtype(out_dtype).itemsize),
    )

    return pl.pallas_call(
        kernel,
        out_shape=jax.ShapeDtypeStruct((M, N), out_dtype),
        grid_spec=pltpu.PrefetchScalarGridSpec(
            num_scalar_prefetch=0,
            grid=grid,
            in_specs=[
                pl.BlockSpec((tm, tk), lambda i, j, k: (i, k)),
                pl.BlockSpec((tk, tn), lambda i, j, k: (k, j)),
                pl.BlockSpec((1, tn), lambda i, j, k: (0, j)),
            ],
            out_specs=pl.BlockSpec((tm, tn), lambda i, j, k: (i, j)),
            scratch_shapes=scratch,
        ),
        compiler_params=pltpu.CompilerParams(
            dimension_semantics=("parallel", "parallel", "arbitrary"),
            vmem_limit_bytes=64 * 1024 * 1024,
        ),
        cost_estimate=cost,
    )(x2d, w_t, b2d)


# ------------------------------------------------------------ public wrapper --

def last_unary_block_epn(x, weight_t, bias=None, *, tm=1024):
    """Forward pass of LastUnaryBlockEPN: y = x @ weight_t + bias.

    x:        (..., in_dim)
    weight_t: (in_dim, out_dim) -- nn.Linear weight pre-transposed ONCE at
              parameter-preparation time (see prepare_linear_params).
    bias:     (out_dim,) or None
    """
    K, N = weight_t.shape
    assert x.shape[-1] == K, (x.shape, weight_t.shape)
    lead_shape = x.shape[:-1]
    M = int(math.prod(lead_shape)) if lead_shape else 1
    out_dtype = x.dtype

    x2d = x.reshape(M, K)
    if bias is None:
        b2d = jnp.zeros((1, N), dtype=weight_t.dtype)
    else:
        b2d = bias.reshape(1, N)

    # Lane-dense output folding (wrapper-side layout plumbing only):
    #   x: (M, K)      -> (M//r, r*K)                (free row-major reshape)
    #   W: (K, N)      -> blockdiag_r(W): (r*K, r*N) (tiny constant expansion)
    #   y: (M//r, r*N) -> (M, N)                     (free row-major reshape)
    # so the kernel's output (and input) lane width becomes 128 and every
    # store is an unmasked full-width vst.
    fold = 1
    if N < 128 and 128 % N == 0:
        r = 128 // N
        w_bytes = (r * K) * (r * N) * jnp.dtype(weight_t.dtype).itemsize
        if M % r == 0 and r * K <= 2048 and w_bytes <= (2 << 20):
            fold = r

    if fold > 1:
        x2d = x2d.reshape(M // fold, fold * K)
        w_t = jnp.kron(jnp.eye(fold, dtype=weight_t.dtype), weight_t)
        b2d = jnp.tile(b2d, (1, fold))
    else:
        w_t = weight_t

    y2d = _linear_2d(x2d, w_t, b2d, out_dtype=out_dtype, tm_cap=tm)
    return y2d.reshape(*lead_shape, N)


# ----------------------------------------------------------------- params ----

def init_linear_params(key, in_dim, out_dim, dtype=jnp.float32):
    """PyTorch nn.Linear default init: kaiming_uniform_(a=sqrt(5)) ->
    U(-1/sqrt(fan_in), 1/sqrt(fan_in)) for both weight and bias."""
    kw, kb = jax.random.split(key)
    bound = 1.0 / math.sqrt(in_dim)
    weight = jax.random.uniform(kw, (out_dim, in_dim), dtype,
                                minval=-bound, maxval=bound)
    bias = jax.random.uniform(kb, (out_dim,), dtype,
                              minval=-bound, maxval=bound)
    return weight, bias


def prepare_linear_params(weight, bias):
    """One-time layout prep: store the weight as (in_dim, out_dim) so the
    per-call path never pays an HBM->HBM transpose."""
    return jnp.asarray(weight).T, (None if bias is None else jnp.asarray(bias))


# ------------------------------------------------------------------- demo ----

if __name__ == "__main__":
    key = jax.random.PRNGKey(0)
    k_x, k_p, k_x2, k_p2 = jax.random.split(key, 4)

    fwd = jax.jit(last_unary_block_epn)

    # EPN-style input: (num_points, num_anchors, in_dim), small out_dim
    # (exercises the lane-dense folded path).
    in_dim, out_dim = 32, 16
    x = jax.random.normal(k_x, (128, 4, in_dim), dtype=jnp.float32)
    weight, bias = init_linear_params(k_p, in_dim, out_dim)
    weight_t, bias_p = prepare_linear_params(weight, bias)      # once, not per call
    weight_t, bias_p = jax.block_until_ready((weight_t, bias_p))

    y = jax.block_until_ready(fwd(x, weight_t, bias_p))
    y_ref = x @ weight.T + bias
    assert y.shape == (128, 4, out_dim), y.shape
    assert jnp.allclose(y, y_ref, atol=1e-5, rtol=1e-5), \
        float(jnp.abs(y - y_ref).max())

    # Second tiny case: odd dims, no folding (exercises the general fallback).
    in_dim2, out_dim2 = 40, 48
    x2 = jax.random.normal(k_x2, (9, 7, in_dim2), dtype=jnp.float32)
    w2, b2 = init_linear_params(k_p2, in_dim2, out_dim2)
    w2_t, b2_p = prepare_linear_params(w2, b2)
    y2 = jax.block_until_ready(fwd(x2, w2_t, b2_p))
    y2_ref = x2 @ w2.T + b2
    assert y2.shape == (9, 7, out_dim2), y2.shape
    assert jnp.allclose(y2, y2_ref, atol=1e-5, rtol=1e-5), \
        float(jnp.abs(y2 - y2_ref).max())

    print("KERNEL_OK")
</pallas_src>

<mosaic_0001>
module attributes {stable_mosaic.version = 11 : i64} {
  func.func @_linear_kernel(%arg0: i32, %arg1: i32, %arg2: i32, %arg3: memref<64x256xf32, #tpu.memory_space<vmem>>, %arg4: memref<256x128xf32, #tpu.memory_space<vmem>>, %arg5: memref<1x128xf32, #tpu.memory_space<vmem>>, %arg6: memref<64x128xf32, #tpu.memory_space<vmem>>) attributes {dimension_semantics = [#tpu.dimension_semantics<parallel>, #tpu.dimension_semantics<parallel>, #tpu.dimension_semantics<arbitrary>], iteration_bounds = array<i64: 1, 1, 1>, scalar_prefetch = 0 : i64, scratch_operands = 0 : i64, tpu.core_type = #tpu.core_type<tc>, window_params = [{transform_indices = @transform_0, window_bounds = array<i64: 64, 256>}, {transform_indices = @transform_1, window_bounds = array<i64: 256, 128>}, {transform_indices = @transform_2, window_bounds = array<i64: 1, 128>}, {transform_indices = @transform_3, window_bounds = array<i64: 64, 128>}]} {
    %c0 = arith.constant 0 : index
    %c0_0 = arith.constant 0 : index
    %0 = vector.load %arg3[%c0, %c0_0] : memref<64x256xf32, #tpu.memory_space<vmem>>, vector<64x256xf32>
    %c0_1 = arith.constant 0 : index
    %c0_2 = arith.constant 0 : index
    %1 = vector.load %arg4[%c0_1, %c0_2] : memref<256x128xf32, #tpu.memory_space<vmem>>, vector<256x128xf32>
    %cst = arith.constant dense<0.000000e+00> : vector<64x128xf32>
    %2 = tpu.matmul %0, %1, %cst {dimension_numbers = #tpu.dot_dimension_numbers<[1], [0], [0], [1], [0, 0, 1, 1], [], []>} : vector<64x256xf32>, vector<256x128xf32>, vector<64x128xf32> -> vector<64x128xf32>
    %c0_3 = arith.constant 0 : index
    %c0_4 = arith.constant 0 : index
    %3 = vector.load %arg5[%c0_3, %c0_4] : memref<1x128xf32, #tpu.memory_space<vmem>>, vector<1x128xf32>
    %4 = vector.broadcast %3 : vector<1x128xf32> to vector<64x128xf32>
    %5 = arith.addf %2, %4 : vector<64x128xf32>
    %c0_5 = arith.constant 0 : index
    %c0_6 = arith.constant 0 : index
    %6 = vector.load %arg6[%c0_5, %c0_6] : memref<64x128xf32, #tpu.memory_space<vmem>>, vector<64x128xf32>
    tpu.vector_store %arg6[%c0_5, %c0_6], %5 {strides = array<i32>} : memref<64x128xf32, #tpu.memory_space<vmem>>, vector<64x128xf32>,
    return
  }
  func.func @transform_0(%arg0: i32, %arg1: i32, %arg2: i32) -> (i32, i32) {
    %c0_i32 = arith.constant 0 : i32
    return %arg0, %arg2 : i32, i32
  }
  func.func @transform_1(%arg0: i32, %arg1: i32, %arg2: i32) -> (i32, i32) {
    %c0_i32 = arith.constant 0 : i32
    return %arg2, %arg1 : i32, i32
  }
  func.func @transform_2(%arg0: i32, %arg1: i32, %arg2: i32) -> (i32, i32) {
    %c0_i32 = arith.constant 0 : i32
    %c0_i32_0 = arith.constant 0 : i32
    return %c0_i32, %arg1 : i32, i32
  }
  func.func @transform_3(%arg0: i32, %arg1: i32, %arg2: i32) -> (i32, i32) {
    %c0_i32 = arith.constant 0 : i32
    return %arg0, %arg1 : i32, i32
  }
}

</mosaic_0001>

<llo_original>
// kernel: last_unary_block_epn.1
$region0: #{last_unary_block_epn.1}
  #allocation0 [shape = 'u32[]', space=smem, size = 0x4, offset = 0x4, fixed_abs, tag = 'smem constant byte address 0x4 - core index']
  #allocation1 [shape = 'u32[72,128]{1,0:T(1,128)}', space=vmem, size = 0x9000, scoped, tag = 'internal scratch']
  %s0 = inlined_call_operand.vmem [shape: f32[64,256], index: 0, kind: input, shape index: {}]
  %s1 = inlined_call_operand.vmem [shape: f32[256,128], index: 1, kind: input, shape index: {}]
  %s2 = inlined_call_operand.vmem [shape: f32[1,128], index: 2, kind: input, shape index: {}]
  %s3 = inlined_call_operand.vmem [shape: f32[64,128], index: 3, kind: output, shape index: {}]
  %s4 = sld [smem:[#allocation0]]
  $region22: #{last_unary_block_epn.1} parent=0
    _
  %s6 = ssub.s32 1, %s4
  %s7 = scalar_select 0, %s6, %s4
  // Predicated region
  $region2: #{last_unary_block_epn.1} parent=0 // pred_check
    _
  $region3: #{last_unary_block_epn.1} parent=0 // pred_check_branch
    %9 = sbr.rel (0) target = $region5
  $region4: #{last_unary_block_epn.1} parent=0 // pred_region
    _
  $region5: #{last_unary_block_epn.1} parent=0 // pred_fallthru
    _
  // Predicated region
  $region6: #{last_unary_block_epn.1} parent=0 // pred_check
    _
  $region7: #{last_unary_block_epn.1} parent=0 // pred_check_branch
    %11 = sbr.rel (0) target = $region9
  $region8: #{last_unary_block_epn.1} parent=0 // pred_region
    _
  $region9: #{last_unary_block_epn.1} parent=0 // pred_fallthru
    _
  // Predicated region
  $region10: #{last_unary_block_epn.1} parent=0 // pred_check
    _
  $region11: #{last_unary_block_epn.1} parent=0 // pred_check_branch
    %13 = sbr.rel (0) target = $region13
  $region12: #{last_unary_block_epn.1} parent=0 // pred_region
    _
  $region13: #{last_unary_block_epn.1} parent=0 // pred_fallthru
    _
  %v14 = vld [vmem:[%s0] sm:$0xff]
  %v15 = vld [vmem:[%s0 + $0x8] sm:$0xff]
  %v16 = vld [vmem:[%s0 + $0x10] sm:$0xff]
  %v17 = vld [vmem:[%s0 + $0x18] sm:$0xff]
  %v18 = vld [vmem:[%s0 + $0x20] sm:$0xff]
  %v19 = vld [vmem:[%s0 + $0x28] sm:$0xff]
  %v20 = vld [vmem:[%s0 + $0x30] sm:$0xff]
  %v21 = vld [vmem:[%s0 + $0x38] sm:$0xff]
  %v22 = vld [vmem:[%s0 + $0x40] sm:$0xff]
  %v23 = vld [vmem:[%s0 + $0x48] sm:$0xff]
  %v24 = vld [vmem:[%s0 + $0x50] sm:$0xff]
  %v25 = vld [vmem:[%s0 + $0x58] sm:$0xff]
  %v26 = vld [vmem:[%s0 + $0x60] sm:$0xff]
  %v27 = vld [vmem:[%s0 + $0x68] sm:$0xff]
  %v28 = vld [vmem:[%s0 + $0x70] sm:$0xff]
  %v29 = vld [vmem:[%s0 + $0x78] sm:$0xff]
  %v30 = vld [vmem:[%s1] sm:$0xff]
  %v31 = vld [vmem:[%s1 + $0x8] sm:$0xff]
  %v32 = vld [vmem:[%s1 + $0x10] sm:$0xff]
  %v33 = vld [vmem:[%s1 + $0x18] sm:$0xff]
  %v34 = vld [vmem:[%s1 + $0x20] sm:$0xff]
  %v35 = vld [vmem:[%s1 + $0x28] sm:$0xff]
  %v36 = vld [vmem:[%s1 + $0x30] sm:$0xff]
  %v37 = vld [vmem:[%s1 + $0x38] sm:$0xff]
  %v38 = vld [vmem:[%s1 + $0x40] sm:$0xff]
  %v39 = vld [vmem:[%s1 + $0x48] sm:$0xff]
  %v40 = vld [vmem:[%s1 + $0x50] sm:$0xff]
  %v41 = vld [vmem:[%s1 + $0x58] sm:$0xff]
  %v42 = vld [vmem:[%s1 + $0x60] sm:$0xff]
  %v43 = vld [vmem:[%s1 + $0x68] sm:$0xff]
  %v44 = vld [vmem:[%s1 + $0x70] sm:$0xff]
  %v45 = vld [vmem:[%s1 + $0x78] sm:$0xff]
  %v46 = vld [vmem:[%s1 + $0x80] sm:$0xff]
  %v47 = vld [vmem:[%s1 + $0x88] sm:$0xff]
  %v48 = vld [vmem:[%s1 + $0x90] sm:$0xff]
  %v49 = vld [vmem:[%s1 + $0x98] sm:$0xff]
  %v50 = vld [vmem:[%s1 + $0xa0] sm:$0xff]
  %v51 = vld [vmem:[%s1 + $0xa8] sm:$0xff]
  %v52 = vld [vmem:[%s1 + $0xb0] sm:$0xff]
  %v53 = vld [vmem:[%s1 + $0xb8] sm:$0xff]
  %v54 = vld [vmem:[%s1 + $0xc0] sm:$0xff]
  %v55 = vld [vmem:[%s1 + $0xc8] sm:$0xff]
  %v56 = vld [vmem:[%s1 + $0xd0] sm:$0xff]
  %v57 = vld [vmem:[%s1 + $0xd8] sm:$0xff]
  %v58 = vld [vmem:[%s1 + $0xe0] sm:$0xff]
  %v59 = vld [vmem:[%s1 + $0xe8] sm:$0xff]
  %v60 = vld [vmem:[%s1 + $0xf0] sm:$0xff]
  %v61 = vld [vmem:[%s1 + $0xf8] sm:$0xff]
  %v62 = vld [vmem:[%s2] sm:$0x1]
  %v64 = vperm.slane %v62, 0
  %66 = vmatpush.msra.mxu0 %v45
  %67 = vmatpush.msra.mxu0 %v44
  %68 = vmatpush.msra.mxu0 %v43
  %69 = vmatpush.msra.mxu0 %v42
  %70 = vmatpush.msra.mxu0 %v41
  %71 = vmatpush.msra.mxu0 %v40
  %72 = vmatpush.msra.mxu0 %v39
  %73 = vmatpush.msra.mxu0 %v38
  %74 = vmatpush.msra.mxu0 %v37
  %75 = vmatpush.msra.mxu0 %v36
  %76 = vmatpush.msra.mxu0 %v35
  %77 = vmatpush.msra.mxu0 %v34
  %78 = vmatpush.msra.mxu0 %v33
  %79 = vmatpush.msra.mxu0 %v32
  %80 = vmatpush.msra.mxu0 %v31
  %81 = vmatpush.msra.mxu0 %v30
  %82 = vmatmul.f32.gmra.mxu0 %v14
  %v83 = vpop.f32.mrf.mxu0
  %v84 = vadd.f32 %v64, %v83
  %85 = vmatmul.f32.gmra.mxu0 %v16
  %v86 = vpop.f32.mrf.mxu0
  %v87 = vadd.f32 %v64, %v86
  %88 = vmatmul.f32.gmra.mxu0 %v18
  %v89 = vpop.f32.mrf.mxu0
  %v90 = vadd.f32 %v64, %v89
  %91 = vmatmul.f32.gmra.mxu0 %v20
  %v92 = vpop.f32.mrf.mxu0
  %v93 = vadd.f32 %v64, %v92
  %94 = vmatmul.f32.gmra.mxu0 %v22
  %v95 = vpop.f32.mrf.mxu0
  %v96 = vadd.f32 %v64, %v95
  %97 = vmatmul.f32.gmra.mxu0 %v24
  %v98 = vpop.f32.mrf.mxu0
  %v99 = vadd.f32 %v64, %v98
  %100 = vmatmul.f32.gmra.mxu0 %v26
  %v101 = vpop.f32.mrf.mxu0
  %v102 = vadd.f32 %v64, %v101
  %103 = vmatmul.f32.gmra.mxu0 %v28
  %v104 = vpop.f32.mrf.mxu0
  %v105 = vadd.f32 %v64, %v104
  %106 = vdwg.mxu0
  %107 = vmatpush.msra.mxu0 %v61
  %108 = vmatpush.msra.mxu0 %v60
  %109 = vmatpush.msra.mxu0 %v59
  %110 = vmatpush.msra.mxu0 %v58
  %111 = vmatpush.msra.mxu0 %v57
  %112 = vmatpush.msra.mxu0 %v56
  %113 = vmatpush.msra.mxu0 %v55
  %114 = vmatpush.msra.mxu0 %v54
  %115 = vmatpush.msra.mxu0 %v53
  %116 = vmatpush.msra.mxu0 %v52
  %117 = vmatpush.msra.mxu0 %v51
  %118 = vmatpush.msra.mxu0 %v50
  %119 = vmatpush.msra.mxu0 %v49
  %120 = vmatpush.msra.mxu0 %v48
  %121 = vmatpush.msra.mxu0 %v47
  %122 = vmatpush.msra.mxu0 %v46
  %123 = vmatmul.f32.gmra.mxu0 %v15
  %v124 = vpop.f32.mrf.mxu0
  %v125 = vadd.f32 %v84, %v124
  %126 = vmatmul.f32.gmra.mxu0 %v17
  %v127 = vpop.f32.mrf.mxu0
  %v128 = vadd.f32 %v87, %v127
  %129 = vmatmul.f32.gmra.mxu0 %v19
  %v130 = vpop.f32.mrf.mxu0
  %v131 = vadd.f32 %v90, %v130
  %132 = vmatmul.f32.gmra.mxu0 %v21
  %v133 = vpop.f32.mrf.mxu0
  %v134 = vadd.f32 %v93, %v133
  %135 = vmatmul.f32.gmra.mxu0 %v23
  %v136 = vpop.f32.mrf.mxu0
  %v137 = vadd.f32 %v96, %v136
  %138 = vmatmul.f32.gmra.mxu0 %v25
  %v139 = vpop.f32.mrf.mxu0
  %v140 = vadd.f32 %v99, %v139
  %141 = vmatmul.f32.gmra.mxu0 %v27
  %v142 = vpop.f32.mrf.mxu0
  %v143 = vadd.f32 %v102, %v142
  %144 = vmatmul.f32.gmra.mxu0 %v29
  %v145 = vpop.f32.mrf.mxu0
  %v146 = vadd.f32 %v105, %v145
  %147 = vdwg.mxu0
  %148 = vst [vmem:[%s3] sm:$0xff] %v125
  %149 = vst [vmem:[%s3 + $0x8] sm:$0xff] %v128
  %150 = vst [vmem:[%s3 + $0x10] sm:$0xff] %v131
  %151 = vst [vmem:[%s3 + $0x18] sm:$0xff] %v134
  %152 = vst [vmem:[%s3 + $0x20] sm:$0xff] %v137
  %153 = vst [vmem:[%s3 + $0x28] sm:$0xff] %v140
  %154 = vst [vmem:[%s3 + $0x30] sm:$0xff] %v143
  %155 = vst [vmem:[%s3 + $0x38] sm:$0xff] %v146
  // Predicated region
  $region14: #{last_unary_block_epn.1} parent=0 // pred_check
    _
  $region15: #{last_unary_block_epn.1} parent=0 // pred_check_branch
    %157 = sbr.rel (0) target = $region17
  $region16: #{last_unary_block_epn.1} parent=0 // pred_region
    _
  $region17: #{last_unary_block_epn.1} parent=0 // pred_fallthru
    _
  // Predicated region
  $region18: #{last_unary_block_epn.1} parent=0 // pred_check
    _
  $region19: #{last_unary_block_epn.1} parent=0 // pred_check_branch
    %159 = sbr.rel (0) target = $region21
  $region20: #{last_unary_block_epn.1} parent=0 // pred_region
    _
  $region21: #{last_unary_block_epn.1} parent=0 // pred_fallthru
    _

</llo_original>
